<compile_context>
chip_gen: v6e
topology: v6e:2x2x1
jax: 0.10.0
libtpu: 0.0.40
codegen_flags: <defaults>
</compile_context>

<pallas_src>
import jax
import jax.numpy as jnp
from jax.experimental import pallas as pl
from jax.experimental.pallas import tpu as pltpu

_EPS = 1e-5
LANE = 128
SUBLANE = 8


def _silu(z):
    # z * sigmoid(z); approx reciprocal routes to the EUP instead of VALU Newton steps.
    return z * pl.reciprocal(1.0 + jnp.exp(-z), approx=True)


def _pick_tile(rows, target):
    """Largest divisor of `rows` <= target, preferring multiples of 16 (bf16
    packed-sublane friendly) over multiples of 8."""
    for align in (16, 8):
        best = None
        t = align
        while t <= min(rows, target):
            if rows % t == 0:
                best = t
            t += align
        if best is not None:
            return best
    return rows


def _vmem_limit_bytes():
    # Per-generation VMEM budget: ~3/4 of physical, capped at 100 MiB
    # (v5e/v6e -> ~96 MiB, v7x -> ~48 MiB).  Fallback if the query is unavailable.
    try:
        cap = int(pltpu.get_tpu_info().vmem_capacity_bytes)
    except Exception:
        cap = 64 * 1024 * 1024
    return max(32 * 1024 * 1024, min(100 * 1024 * 1024, (cap * 3) // 4))


# --------------------------- time MLP ----------------------------------------
def _time_kernel(t_ref, wt_ref, bt_ref, o_ref):
    tt = jnp.dot(t_ref[...], wt_ref[...], preferred_element_type=jnp.float32)
    o_ref[...] = _silu(tt + bt_ref[...])


# --------------------------- pass 1 -------------------------------------------
def _make_pass1_kernel(Wp2, TR, SUB, RBUF, Cp):
    # conv3x3 (padding=1, bias dropped -- cancelled by the training-mode BN that
    # follows) as 9 shifted accumulating MXU matmuls over a halo'd row window.
    # TODO(synk): partial im2col along W (K=3*Cp) would better fill the 256x256
    # MXU on v6e/v7x; not done here to keep lowering simple.
    def kernel(xin_hbm, w3_ref, mask_ref, h1_ref, s1_ref, xbuf, xf32, sem):
        n = pl.program_id(0)
        j = pl.program_id(1)
        # Manual halo DMA: the overlapping row window [j*TR, j*TR + RBUF) of this
        # sample cannot be expressed as a non-overlapping Blocked BlockSpec.
        cp = pltpu.make_async_copy(xin_hbm.at[n, pl.ds(j * TR, RBUF), :], xbuf, sem)
        cp.start()
        cp.wait()
        # One upcast to f32: the per-tap row offsets (dy*Wp2+dx) are arbitrary and
        # unaligned sublane slices are cheapest/safest on a 32-bit buffer.
        # TODO(synk): drop this staging cast once packed-dtype sublane-offset
        # slices are guaranteed by the lowering; the bf16 HBM/DMA saving stays.
        xf32[...] = xbuf[...].astype(jnp.float32)

        ssum = jnp.zeros((1, Cp), jnp.float32)
        ssq = jnp.zeros((1, Cp), jnp.float32)
        # Sub-tile rows so the 9-tap accumulator lives in vregs and each h1 row
        # is written exactly once (no read-modify-write of the output ref).
        for s in range(TR // SUB):
            base = s * SUB
            acc = None
            for dy in range(3):
                for dx in range(3):
                    off = dy * Wp2 + dx
                    lhs = xf32[pl.ds(base + off, SUB), :].astype(jnp.bfloat16)
                    rhs = w3_ref[pl.ds((dy * 3 + dx) * Cp, Cp), :]
                    c = jnp.dot(lhs, rhs, preferred_element_type=jnp.float32)
                    acc = c if acc is None else acc + c
            h1_ref[pl.ds(base, SUB), :] = acc.astype(h1_ref.dtype)
            # BN-1 partial stats from the f32 accumulator (before bf16 store),
            # masked so the 2 junk W-pad columns per image row are excluded.
            valid = mask_ref[pl.ds(base, SUB), :]
            hm = acc * valid
            ssum = ssum + jnp.sum(hm, axis=0, keepdims=True)
            ssq = ssq + jnp.sum(hm * acc, axis=0, keepdims=True)

        r8 = jax.lax.broadcasted_iota(jnp.int32, (8, Cp), 0)
        s1_ref[...] = jnp.where(r8 == 0, ssum,
                                jnp.where(r8 == 1, ssq, 0.0)).reshape(1, 8, Cp)

    return kernel


# --------------------------- pass 2 -------------------------------------------
def _make_pass2_kernel(Cp):
    def kernel(h1_ref, sc1_ref, sh1_ref, t_ref, w1_ref, mask_ref, h2_ref, s2_ref):
        h = h1_ref[...].astype(jnp.float32) * sc1_ref[...] + sh1_ref[...]   # BN-1
        h = jnp.maximum(h, 0.0)                                             # ReLU
        h = h + t_ref[...].reshape(1, Cp)                                   # + time (VPU bcast)
        h = jnp.dot(h.astype(jnp.bfloat16), w1_ref[...],                    # conv1x1 (bias cancelled by BN-2)
                    preferred_element_type=jnp.float32)
        # BN-2 partial stats from the f32 result (before the bf16 store)
        valid = mask_ref[...]
        hm = h * valid
        ssum = jnp.sum(hm, axis=0, keepdims=True)
        ssq = jnp.sum(hm * h, axis=0, keepdims=True)
        r8 = jax.lax.broadcasted_iota(jnp.int32, (8, Cp), 0)
        s2_ref[...] = jnp.where(r8 == 0, ssum,
                                jnp.where(r8 == 1, ssq, 0.0)).reshape(1, 8, Cp)
        h2_ref[...] = h.astype(h2_ref.dtype)

    return kernel


# --------------------------- pass 3 -------------------------------------------
def _pass3_kernel(h2_ref, sc2_ref, sh2_ref, xres_ref, out_ref):
    h = h2_ref[...].astype(jnp.float32) * sc2_ref[...] + sh2_ref[...]   # BN-2
    h = _silu(h)                                                        # SiLU
    out_ref[...] = (h + xres_ref[...].astype(jnp.float32)).astype(out_ref.dtype)


# --------------------------- wrapper ------------------------------------------
def resnet_block_forward(x_nchw, t_emb, params, *,
                         conv_tile_rows=512, stream_tile_rows=1024):
    """Pallas implementation. x_nchw: (N, C, H, W) f32; t_emb: (N, T) f32."""
    N, C, H, W = x_nchw.shape
    assert C == params["w3"].shape[-1], \
        "module quirk (BatchNorm2d(in_channels)) requires Cin == Cout"
    T = t_emb.shape[-1]

    f32, bf16 = jnp.float32, jnp.bfloat16
    Cp = LANE * pl.cdiv(C, LANE)          # lane-dense channel padding
    Tp = LANE * pl.cdiv(T, LANE)
    Wp2 = W + 2
    R_out = H * Wp2                        # rows per sample (incl. 2 junk cols/row)
    # TODO(synk): lift this restriction with a pl.when-masked ragged last tile.
    assert R_out % SUBLANE == 0, "H*(W+2) must be a multiple of 8"

    TR1 = _pick_tile(R_out, conv_tile_rows)     # pass-1 row tile
    SUB = _pick_tile(TR1, 64)                   # in-kernel single-write sub-tile
    J1 = R_out // TR1
    TR2 = _pick_tile(R_out, stream_tile_rows)   # pass-2/3 row tile (HBM-bound streams)
    J2 = R_out // TR2

    HALO = 2 * Wp2 + 2                          # conv halo in flattened rows
    HALO_BLK = 16 * pl.cdiv(HALO, 16)
    RBUF = TR1 + HALO_BLK
    R_in = R_out + HALO_BLK                     # padded-input rows per sample
    Np8 = SUBLANE * pl.cdiv(N, SUBLANE)

    # ---------------- layout glue (pure data movement) ----------------
    # TODO(synk): fold the NCHW<->NHWC transposes, spatial pad and final slice
    # into the pass-1 / pass-3 index_maps to remove these XLA round trips.
    x_nhwc = jnp.transpose(x_nchw, (0, 2, 3, 1)).astype(f32)
    xpad = jnp.pad(x_nhwc, ((0, 0), (1, 1), (1, 1), (0, Cp - C)))      # (N, H+2, Wp2, Cp)
    xin = xpad.reshape(N, (H + 2) * Wp2, Cp)
    xin = jnp.pad(xin, ((0, 0), (0, R_in - (H + 2) * Wp2), (0, 0))).astype(bf16)
    xres = jnp.pad(x_nhwc, ((0, 0), (0, 0), (0, 2), (0, Cp - C)))
    xres = xres.reshape(N * R_out, Cp).astype(bf16)

    # validity mask: excludes the 2 junk W-pad columns per image row from BN stats
    col = jnp.arange(R_out, dtype=jnp.int32) % Wp2
    mask = (col < W).astype(f32).reshape(R_out, 1)

    w3 = jnp.zeros((3, 3, Cp, Cp), f32).at[:, :, :C, :C].set(params["w3"].astype(f32))
    w3 = w3.reshape(9 * Cp, Cp).astype(bf16)                           # tap-major (9*Cp, Cp)
    wt = jnp.zeros((Tp, Cp), f32).at[:T, :C].set(params["wt"].astype(f32)).astype(bf16)
    w1 = jnp.zeros((Cp, Cp), f32).at[:C, :C].set(params["w1"].astype(f32)).astype(bf16)

    def pad_vec(p):
        return jnp.zeros((1, Cp), f32).at[0, :C].set(p.astype(f32))

    bt = pad_vec(params["bt"])
    g1, be1 = pad_vec(params["g1"]), pad_vec(params["be1"])
    g2, be2 = pad_vec(params["g2"]), pad_vec(params["be2"])
    t_in = jnp.zeros((Np8, Tp), f32).at[:N, :T].set(t_emb.astype(f32)).astype(bf16)

    vmem = _vmem_limit_bytes()
    cp_g1 = pltpu.CompilerParams(dimension_semantics=("arbitrary",),
                                 vmem_limit_bytes=vmem)
    cp_g2 = pltpu.CompilerParams(dimension_semantics=("parallel", "parallel"),
                                 vmem_limit_bytes=vmem)

    # ---------- time MLP: Linear + SiLU (one tiny MXU matmul for all samples) ----------
    tact_full = pl.pallas_call(
        _time_kernel,
        grid=(1,),
        in_specs=[pl.BlockSpec((Np8, Tp), lambda i: (0, 0)),
                  pl.BlockSpec((Tp, Cp), lambda i: (0, 0)),
                  pl.BlockSpec((1, Cp), lambda i: (0, 0))],
        out_specs=pl.BlockSpec((Np8, Cp), lambda i: (0, 0)),
        out_shape=jax.ShapeDtypeStruct((Np8, Cp), f32),
        compiler_params=cp_g1,
    )(t_in, wt, bt)
    tact = tact_full[:N].reshape(N, 1, Cp)

    # ---------- pass 1: conv3x3 + BN-1 partial stats (grid (sample, row-tile)) ----------
    h1, st1 = pl.pallas_call(
        _make_pass1_kernel(Wp2, TR1, SUB, RBUF, Cp),
        grid=(N, J1),
        in_specs=[
            pl.BlockSpec(memory_space=pl.ANY),                    # xin (bf16, stays in HBM)
            # TODO(synk): pipeline_mode=pl.Buffered(1) on the constant-index weight
            # would avoid double-buffering it in VMEM (matters at large Cp on v7x).
            pl.BlockSpec((9 * Cp, Cp), lambda n, j: (0, 0)),
            pl.BlockSpec((TR1, 1), lambda n, j: (j, 0)),
        ],
        out_specs=[
            pl.BlockSpec((TR1, Cp), lambda n, j: (n * J1 + j, 0)),
            pl.BlockSpec((1, 8, Cp), lambda n, j: (n * J1 + j, 0, 0)),
        ],
        out_shape=[
            jax.ShapeDtypeStruct((N * R_out, Cp), bf16),
            jax.ShapeDtypeStruct((N * J1, 8, Cp), f32),
        ],
        scratch_shapes=[
            pltpu.VMEM((RBUF, Cp), bf16),       # DMA landing buffer (halo'd rows)
            pltpu.VMEM((RBUF, Cp), f32),        # f32 staging for unaligned tap slices
            pltpu.SemaphoreType.DMA(()),
        ],
        compiler_params=cp_g2,
    )(xin, w3, mask)

    cnt = float(N * H * W)
    # TODO(synk): E[x^2]-E[x]^2 in f32 can cancel for very large N*H*W; switch to
    # centered per-tile partials if used at much larger scale.
    mean1 = st1[:, 0, :].sum(axis=0) / cnt
    var1 = st1[:, 1, :].sum(axis=0) / cnt - mean1 * mean1
    sc1 = (g1[0] * jax.lax.rsqrt(var1 + _EPS)).reshape(1, Cp)
    sh1 = (be1[0] - mean1 * sc1[0]).reshape(1, Cp)

    # ---------- pass 2: BN-1 + ReLU + time add + conv1x1 + BN-2 partial stats ----------
    h2, st2 = pl.pallas_call(
        _make_pass2_kernel(Cp),
        grid=(N, J2),
        in_specs=[
            pl.BlockSpec((TR2, Cp), lambda n, j: (n * J2 + j, 0)),
            pl.BlockSpec((1, Cp), lambda n, j: (0, 0)),
            pl.BlockSpec((1, Cp), lambda n, j: (0, 0)),
            pl.BlockSpec((1, 1, Cp), lambda n, j: (n, 0, 0)),
            pl.BlockSpec((Cp, Cp), lambda n, j: (0, 0)),
            pl.BlockSpec((TR2, 1), lambda n, j: (j, 0)),
        ],
        out_specs=[
            pl.BlockSpec((TR2, Cp), lambda n, j: (n * J2 + j, 0)),
            pl.BlockSpec((1, 8, Cp), lambda n, j: (n * J2 + j, 0, 0)),
        ],
        out_shape=[
            jax.ShapeDtypeStruct((N * R_out, Cp), bf16),
            jax.ShapeDtypeStruct((N * J2, 8, Cp), f32),
        ],
        compiler_params=cp_g2,
    )(h1, sc1, sh1, tact, w1, mask)

    mean2 = st2[:, 0, :].sum(axis=0) / cnt
    var2 = st2[:, 1, :].sum(axis=0) / cnt - mean2 * mean2
    sc2 = (g2[0] * jax.lax.rsqrt(var2 + _EPS)).reshape(1, Cp)
    sh2 = (be2[0] - mean2 * sc2[0]).reshape(1, Cp)

    # ---------- pass 3: BN-2 + SiLU + residual ----------
    out_rows = pl.pallas_call(
        _pass3_kernel,
        grid=(N, J2),
        in_specs=[
            pl.BlockSpec((TR2, Cp), lambda n, j: (n * J2 + j, 0)),
            pl.BlockSpec((1, Cp), lambda n, j: (0, 0)),
            pl.BlockSpec((1, Cp), lambda n, j: (0, 0)),
            pl.BlockSpec((TR2, Cp), lambda n, j: (n * J2 + j, 0)),
        ],
        out_specs=pl.BlockSpec((TR2, Cp), lambda n, j: (n * J2 + j, 0)),
        out_shape=jax.ShapeDtypeStruct((N * R_out, Cp), f32),
        compiler_params=cp_g2,
    )(h2, sc2, sh2, xres)

    out = out_rows.reshape(N, H, Wp2, Cp)[:, :, :W, :C]   # drop W-pad cols + channel pad
    return jnp.transpose(out, (0, 3, 1, 2)).astype(x_nchw.dtype)


# --------------------------- pure-JAX reference -------------------------------
def ref_forward(x_nchw, t_emb, params):
    """Faithful f32 reference of the PyTorch forward (training-mode BatchNorm)."""
    x = jnp.transpose(x_nchw, (0, 2, 3, 1)).astype(jnp.float32)
    h = jax.lax.conv_general_dilated(
        x, params["w3"], (1, 1), "SAME",
        dimension_numbers=("NHWC", "HWIO", "NHWC")) + params["b3"]
    m = h.mean(axis=(0, 1, 2)); s = ((h - m) ** 2).mean(axis=(0, 1, 2))
    h = (h - m) / jnp.sqrt(s + _EPS) * params["g1"] + params["be1"]
    h = jnp.maximum(h, 0.0)
    t = t_emb @ params["wt"] + params["bt"]
    t = t * jax.nn.sigmoid(t)
    h = h + t[:, None, None, :]
    h = h @ params["w1"] + params["b1c"]
    m2 = h.mean(axis=(0, 1, 2)); s2 = ((h - m2) ** 2).mean(axis=(0, 1, 2))
    h = (h - m2) / jnp.sqrt(s2 + _EPS) * params["g2"] + params["be2"]
    h = h * jax.nn.sigmoid(h)
    h = h + x
    return jnp.transpose(h, (0, 3, 1, 2))


if __name__ == "__main__":
    key = jax.random.PRNGKey(0)
    N, C, H, W, T = 2, 8, 16, 16, 32   # in_channels == out_channels == 8, t_emb_dim == 32
    ks = jax.random.split(key, 12)
    params = {
        "w3":  jax.random.normal(ks[0], (3, 3, C, C), jnp.float32) * 0.1,   # HWIO
        "b3":  jax.random.normal(ks[1], (C,), jnp.float32) * 0.1,
        "g1":  1.0 + 0.1 * jax.random.normal(ks[2], (C,), jnp.float32),
        "be1": 0.1 * jax.random.normal(ks[3], (C,), jnp.float32),
        "wt":  jax.random.normal(ks[4], (T, C), jnp.float32) * 0.1,         # (T, C)
        "bt":  0.1 * jax.random.normal(ks[5], (C,), jnp.float32),
        "w1":  jax.random.normal(ks[6], (C, C), jnp.float32) * 0.1,         # (in, out)
        "b1c": 0.1 * jax.random.normal(ks[7], (C,), jnp.float32),
        "g2":  1.0 + 0.1 * jax.random.normal(ks[8], (C,), jnp.float32),
        "be2": 0.1 * jax.random.normal(ks[9], (C,), jnp.float32),
    }
    x = jax.random.normal(ks[10], (N, C, H, W), jnp.float32)
    t_emb = jax.random.normal(ks[11], (N, T), jnp.float32)

    out = jax.block_until_ready(resnet_block_forward(x, t_emb, params))
    ref = ref_forward(x, t_emb, params)
    assert out.shape == (N, C, H, W)
    max_err = float(jnp.max(jnp.abs(out - ref)))
    # bf16 MXU inputs / bf16 intermediate storage (f32 accumulation + f32 BN
    # stats) and the approx-EUP sigmoid vs. an exact-f32 reference.
    assert jnp.allclose(out, ref, atol=5e-2, rtol=5e-2), f"max_err={max_err}"
    print("KERNEL_OK")
</pallas_src>

<mosaic_0001>
module attributes {stable_mosaic.version = 11 : i64} {
  func.func @_time_kernel(%arg0: i32, %arg1: memref<8x128xbf16, #tpu.memory_space<vmem>>, %arg2: memref<128x128xbf16, #tpu.memory_space<vmem>>, %arg3: memref<1x128xf32, #tpu.memory_space<vmem>>, %arg4: memref<8x128xf32, #tpu.memory_space<vmem>>) attributes {dimension_semantics = [#tpu.dimension_semantics<arbitrary>], iteration_bounds = array<i64: 1>, scalar_prefetch = 0 : i64, scratch_operands = 0 : i64, tpu.core_type = #tpu.core_type<tc>, window_params = [{pipeline_mode = #tpu.pipeline_mode<synchronous>, transform_indices = @transform_0, window_bounds = array<i64: 8, 128>}, {pipeline_mode = #tpu.pipeline_mode<synchronous>, transform_indices = @transform_1, window_bounds = array<i64: 128, 128>}, {pipeline_mode = #tpu.pipeline_mode<synchronous>, transform_indices = @transform_2, window_bounds = array<i64: 1, 128>}, {pipeline_mode = #tpu.pipeline_mode<synchronous>, transform_indices = @transform_3, window_bounds = array<i64: 8, 128>}]} {
    %c0 = arith.constant 0 : index
    %c0_0 = arith.constant 0 : index
    %0 = vector.load %arg1[%c0, %c0_0] : memref<8x128xbf16, #tpu.memory_space<vmem>>, vector<8x128xbf16>
    %c0_1 = arith.constant 0 : index
    %c0_2 = arith.constant 0 : index
    %1 = vector.load %arg2[%c0_1, %c0_2] : memref<128x128xbf16, #tpu.memory_space<vmem>>, vector<128x128xbf16>
    %cst = arith.constant dense<0.000000e+00> : vector<8x128xf32>
    %2 = tpu.matmul %0, %1, %cst {dimension_numbers = #tpu.dot_dimension_numbers<[1], [0], [0], [1], [0, 0, 1, 1], [], []>} : vector<8x128xbf16>, vector<128x128xbf16>, vector<8x128xf32> -> vector<8x128xf32>
    %c0_3 = arith.constant 0 : index
    %c0_4 = arith.constant 0 : index
    %3 = vector.load %arg3[%c0_3, %c0_4] : memref<1x128xf32, #tpu.memory_space<vmem>>, vector<1x128xf32>
    %4 = vector.broadcast %3 : vector<1x128xf32> to vector<8x128xf32>
    %5 = arith.addf %2, %4 : vector<8x128xf32>
    %cst_5 = arith.constant 0.000000e+00 : f32
    %6 = vector.broadcast %cst_5 : f32 to vector<8x128xf32>
    %7 = arith.subf %6, %5 : vector<8x128xf32>
    %8 = math.exp %7 : vector<8x128xf32>
    %cst_6 = arith.constant 1.000000e+00 : f32
    %9 = vector.broadcast %cst_6 : f32 to vector<8x128xf32>
    %10 = arith.addf %9, %8 : vector<8x128xf32>
    %11 = tpu.reciprocal %10 {approx = true} : vector<8x128xf32> -> vector<8x128xf32>
    %12 = arith.mulf %5, %11 : vector<8x128xf32>
    %c0_7 = arith.constant 0 : index
    %c0_8 = arith.constant 0 : index
    %13 = vector.load %arg4[%c0_7, %c0_8] : memref<8x128xf32, #tpu.memory_space<vmem>>, vector<8x128xf32>
    tpu.vector_store %arg4[%c0_7, %c0_8], %12 {strides = array<i32>} : memref<8x128xf32, #tpu.memory_space<vmem>>, vector<8x128xf32>,
    return
  }
  func.func @transform_0(%arg0: i32) -> (i32, i32) {
    %c0_i32 = arith.constant 0 : i32
    %c0_i32_0 = arith.constant 0 : i32
    %c0_i32_1 = arith.constant 0 : i32
    return %c0_i32, %c0_i32_0 : i32, i32
  }
  func.func @transform_1(%arg0: i32) -> (i32, i32) {
    %c0_i32 = arith.constant 0 : i32
    %c0_i32_0 = arith.constant 0 : i32
    %c0_i32_1 = arith.constant 0 : i32
    return %c0_i32, %c0_i32_0 : i32, i32
  }
  func.func @transform_2(%arg0: i32) -> (i32, i32) {
    %c0_i32 = arith.constant 0 : i32
    %c0_i32_0 = arith.constant 0 : i32
    %c0_i32_1 = arith.constant 0 : i32
    return %c0_i32, %c0_i32_0 : i32, i32
  }
  func.func @transform_3(%arg0: i32) -> (i32, i32) {
    %c0_i32 = arith.constant 0 : i32
    %c0_i32_0 = arith.constant 0 : i32
    %c0_i32_1 = arith.constant 0 : i32
    return %c0_i32, %c0_i32_0 : i32, i32
  }
}

</mosaic_0001>

<llo_original>
// kernel: tpu_custom_call.1
$region0: #{tpu_custom_call.1}
  #allocation0 [shape = 'u32[]', space=smem, size = 0x4, offset = 0x4, fixed_abs, tag = 'smem constant byte address 0x4 - core index']
  #allocation1 [shape = 'u32[144,128]{1,0:T(1,128)}', space=vmem, size = 0x12000, scoped, tag = 'internal scratch']
  %s0 = inlined_call_operand.hbm [shape: bf16[8,128], index: 0, kind: input, shape index: {}]
  %s1 = inlined_call_operand.hbm [shape: bf16[128,128], index: 1, kind: input, shape index: {}]
  %s2 = inlined_call_operand.vmem [shape: f32[1,128], index: 2, kind: input, shape index: {}]
  %s3 = inlined_call_operand.hbm [shape: f32[8,128], index: 3, kind: output, shape index: {}]
  %s4 = sld [smem:[#allocation0]]
  $region30: #{tpu_custom_call.1} parent=0
    _
  %s6 = ssub.s32 1, %s4
  %s7 = scalar_select 0, %s6, %s4
  $region1: #{tpu_custom_call.1} parent=0
    #allocation2 [shape = 'u8[2048]{0}', space=vmem, size = 0x800, scoped, tag = 'input window, operand 0, single buffered']
    #allocation3 [shape = 's32[1]{0}', space=sflag, size = 0x4, scoped, tag = 'scoped memory for tpu_custom_call.1']
    #allocation4 [shape = 's32[1]{0}', space=sflag, size = 0x4, scoped, tag = 'scoped memory for tpu_custom_call.1']
    #allocation5 [shape = 'u8[32768]{0}', space=vmem, size = 0x8000, scoped, tag = 'input window, operand 1, single buffered']
    #allocation6 [shape = 's32[1]{0}', space=sflag, size = 0x4, scoped, tag = 'scoped memory for tpu_custom_call.1']
    #allocation7 [shape = 'u8[4096]{0}', space=vmem, size = 0x1000, scoped, tag = 'output window, operand 0, single buffered']
    %8 = vsyncpa [#allocation3], 0
    %9 = vsyncpa [#allocation6], 0
    %10 = vsyncpa [#allocation4], 0
    // Predicated region
    $region2: #{tpu_custom_call.1} parent=1 // pred_check
      _
    $region3: #{tpu_custom_call.1} parent=1 // pred_check_branch
      %12 = sbr.rel (0) target = $region5
    $region4: #{tpu_custom_call.1} parent=1 // pred_region
      %s14 = ssub.s32 64, 64
      %15 = vsyncadd [#allocation3], %s14
      %s17 = sshll.u32 [#allocation2], 4
      %s18 = int_to_ptr.vmem [resolvable:$true] %s17
      %20 = dma.hbm_to_vmem [thread:$0]  %s0, 64, %s18, [#allocation3]
    $region5: #{tpu_custom_call.1} parent=1 // pred_fallthru
      _
    // Predicated region
    $region6: #{tpu_custom_call.1} parent=1 // pred_check
      _
    $region7: #{tpu_custom_call.1} parent=1 // pred_check_branch
      %22 = sbr.rel (0) target = $region9
    $region8: #{tpu_custom_call.1} parent=1 // pred_region
      %s24 = ssub.s32 1024, 1024
      %25 = vsyncadd [#allocation6], %s24
      %s26 = sshll.u32 [#allocation5], 4
      %s27 = int_to_ptr.vmem [resolvable:$true] %s26
      %32 = dma.hbm_to_vmem [thread:$0]  %s1, 1024, %s27, [#allocation6], 64, 64, 4
    $region9: #{tpu_custom_call.1} parent=1 // pred_fallthru
      _
    // Predicated region
    $region10: #{tpu_custom_call.1} parent=1 // pred_check
      _
    $region11: #{tpu_custom_call.1} parent=1 // pred_check_branch
      %34 = sbr.rel (0) target = $region13
    $region12: #{tpu_custom_call.1} parent=1 // pred_region
      _
    $region13: #{tpu_custom_call.1} parent=1 // pred_fallthru
      _
    // Predicated region
    $region14: #{tpu_custom_call.1} parent=1 // pred_check
      _
    $region15: #{tpu_custom_call.1} parent=1 // pred_check_branch
      %36 = sbr.rel (0) target = $region17
    $region16: #{tpu_custom_call.1} parent=1 // pred_region
      %37 = dma.done [#allocation3], 64
    $region17: #{tpu_custom_call.1} parent=1 // pred_fallthru
      _
    // Predicated region
    $region18: #{tpu_custom_call.1} parent=1 // pred_check
      _
    $region19: #{tpu_custom_call.1} parent=1 // pred_check_branch
      %39 = sbr.rel (0) target = $region21
    $region20: #{tpu_custom_call.1} parent=1 // pred_region
      %40 = dma.done [#allocation6], 1024
    $region21: #{tpu_custom_call.1} parent=1 // pred_fallthru
      _
    %v42 = vld [vmem:[#allocation2] sm:$0xf]
    %v43 = vld [vmem:[#allocation5] sm:$0xf]
    %v44 = vld [vmem:[#allocation5 + $0x4] sm:$0xf]
    %v45 = vld [vmem:[#allocation5 + $0x8] sm:$0xf]
    %v46 = vld [vmem:[#allocation5 + $0xc] sm:$0xf]
    %v47 = vld [vmem:[#allocation5 + $0x10] sm:$0xf]
    %v48 = vld [vmem:[#allocation5 + $0x14] sm:$0xf]
    %v49 = vld [vmem:[#allocation5 + $0x18] sm:$0xf]
    %v50 = vld [vmem:[#allocation5 + $0x1c] sm:$0xf]
    %v51 = vld [vmem:[#allocation5 + $0x20] sm:$0xf]
    %v52 = vld [vmem:[#allocation5 + $0x24] sm:$0xf]
    %v53 = vld [vmem:[#allocation5 + $0x28] sm:$0xf]
    %v54 = vld [vmem:[#allocation5 + $0x2c] sm:$0xf]
    %v55 = vld [vmem:[#allocation5 + $0x30] sm:$0xf]
    %v56 = vld [vmem:[#allocation5 + $0x34] sm:$0xf]
    %v57 = vld [vmem:[#allocation5 + $0x38] sm:$0xf]
    %v58 = vld [vmem:[#allocation5 + $0x3c] sm:$0xf]
    %v59 = vld [vmem:[%s2] sm:$0x1]
    %v61 = vlaneseq
    %v62 = vshrl.u32 %v61, 7
    %v63 = vsub.s32 0, %v62
    %v64 = vrot.slane %v59, %v63
    %v82 = vunpack.c.l.b16 %v43
    %v83 = vunpack.c.l.b16 %v44
    %v84 = vunpack.c.l.b16 %v45
    %v85 = vunpack.c.l.b16 %v46
    %v86 = vunpack.c.l.b16 %v47
    %v87 = vunpack.c.l.b16 %v48
    %v88 = vunpack.c.l.b16 %v49
    %v89 = vunpack.c.l.b16 %v50
    %v90 = vunpack.c.l.b16 %v51
    %v91 = vunpack.c.l.b16 %v52
    %v92 = vunpack.c.l.b16 %v53
    %v93 = vunpack.c.l.b16 %v54
    %v94 = vunpack.c.l.b16 %v55
    %v95 = vunpack.c.l.b16 %v56
    %v96 = vunpack.c.l.b16 %v57
    %v97 = vunpack.c.l.b16 %v58
    %v98 = vpack.c.b16 %v83, %v82
    %v99 = vpack.c.b16 %v85, %v84
    %v100 = vpack.c.b16 %v87, %v86
    %v101 = vpack.c.b16 %v89, %v88
    %v102 = vpack.c.b16 %v91, %v90
    %v103 = vpack.c.b16 %v93, %v92
    %v104 = vpack.c.b16 %v95, %v94
    %v105 = vpack.c.b16 %v97, %v96
    %114 = vmatprep.subr.bf16.mxu0 0
    %115 = vmatpush1.bf16.msra.mxu0 %v105
    %116 = vmatprep.subr.bf16.mxu0 0
    %117 = vmatpush1.bf16.msra.mxu0 %v104
    %118 = vmatprep.subr.bf16.mxu0 0
    %119 = vmatpush1.bf16.msra.mxu0 %v103
    %120 = vmatprep.subr.bf16.mxu0 0
    %121 = vmatpush1.bf16.msra.mxu0 %v102
    %122 = vmatprep.subr.bf16.mxu0 0
    %123 = vmatpush1.bf16.msra.mxu0 %v101
    %124 = vmatprep.subr.bf16.mxu0 0
    %125 = vmatpush1.bf16.msra.mxu0 %v100
    %126 = vmatprep.subr.bf16.mxu0 0
    %127 = vmatpush1.bf16.msra.mxu0 %v99
    %128 = vmatprep.subr.bf16.mxu0 0
    %129 = vmatpush1.bf16.msra.mxu0 %v98
    %130 = vmatprep.subr.bf16.mxu0 0
    %131 = vmatpush2.bf16.msra.mxu0 0
    %132 = vmatprep.subr.bf16.mxu0 0
    %133 = vmatpush2.bf16.msra.mxu0 0
    %134 = vmatprep.subr.bf16.mxu0 0
    %135 = vmatpush2.bf16.msra.mxu0 0
    %136 = vmatprep.subr.bf16.mxu0 0
    %137 = vmatpush2.bf16.msra.mxu0 0
    %138 = vmatprep.subr.bf16.mxu0 0
    %139 = vmatpush2.bf16.msra.mxu0 0
    %140 = vmatprep.subr.bf16.mxu0 0
    %141 = vmatpush2.bf16.msra.mxu0 0
    %142 = vmatprep.subr.bf16.mxu0 0
    %143 = vmatpush2.bf16.msra.mxu0 0
    %144 = vmatprep.subr.bf16.mxu0 0
    %145 = vmatpush2.bf16.msra.mxu0 0
    %146 = vmatprep.mubr.bf16.mxu0 0
    %147 = vmatmul.mubr.bf16.gmra.mxu0 %v42
    %v148 = vpop.f32.mrf.mxu0
    %v149 = vadd.f32 %v64, %v148
    %v150 = vpop.f32.mrf.mxu0
    %v151 = vpop.f32.mrf.mxu0
    %v152 = vpop.f32.mrf.mxu0
    %153 = vdwg.mxu0
    %v154 = vsub.f32 0.0, %v149
    %v155 = vmul.f32 %v154, 1.442695
    %v156 = vpow.pop %v155
    %v157 = vadd.f32 %v156, 1.0
    %v158 = vrcp.pop %v157
    %v159 = vmul.f32 %v149, %v158
    %160 = vst [vmem:[#allocation7] sm:$0xff] %v159
    // Predicated region
    $region22: #{tpu_custom_call.1} parent=1 // pred_check
      _
    $region23: #{tpu_custom_call.1} parent=1 // pred_check_branch
      %162 = sbr.rel (0) target = $region25
    $region24: #{tpu_custom_call.1} parent=1 // pred_region
      %s164 = ssub.s32 128, 128
      %165 = vsyncadd [#allocation4], %s164
      %s167 = sshll.u32 [#allocation7], 4
      %s168 = int_to_ptr.vmem [resolvable:$true] %s167
      %170 = dma.vmem_to_hbm [thread:$0]  %s168, 128, %s3, [#allocation4]
    $region25: #{tpu_custom_call.1} parent=1 // pred_fallthru
      _
    // Predicated region
    $region26: #{tpu_custom_call.1} parent=1 // pred_check
      _
    $region27: #{tpu_custom_call.1} parent=1 // pred_check_branch
      %172 = sbr.rel (0) target = $region29
    $region28: #{tpu_custom_call.1} parent=1 // pred_region
      %173 = dma.done [#allocation4], 128
    $region29: #{tpu_custom_call.1} parent=1 // pred_fallthru
      _
    %174 = vsyncpa [#allocation3], 1
    %175 = vsyncpa [#allocation6], 1
    %176 = vsyncpa [#allocation4], 1

</llo_original>
